<compile_context>
chip_gen: v7x
topology: tpu7x:2x2x1
jax: 0.10.0
libtpu: 0.0.40
codegen_flags: <defaults>
</compile_context>

<pallas_src>
import jax
import jax.numpy as jnp
from jax.experimental import pallas as pl
from jax.experimental.pallas import tpu as pltpu

EPS = 1e-12       # module's self.eps
BN_EPS = 1e-5     # nn.BatchNorm1d default eps


def _round_up(v, m):
    return (v + m - 1) // m * m


def _asp_kernel(len_ref, x_ref, w1_ref, b1_ref, bns_ref, bnb_ref, w2_ref, b2_ref,
                out_ref, m_sc, s0_sc, s1_sc, s2_sc):
    n = pl.program_id(0)
    l = pl.program_id(1)
    lt = x_ref.shape[-1]
    C = x_ref.shape[0]

    @pl.when(l == 0)
    def _init():
        m_sc[...] = jnp.full_like(m_sc, -jnp.inf)
        s0_sc[...] = jnp.zeros_like(s0_sc)
        s1_sc[...] = jnp.zeros_like(s1_sc)
        s2_sc[...] = jnp.zeros_like(s2_sc)

    x = x_ref[...]                                                    # [C, Lt]

    # tdnn: Conv1d(C->A, k=1) -> ReLU -> BatchNorm1d (eval, folded scale/bias)
    h = jnp.dot(w1_ref[...], x, preferred_element_type=jnp.float32)   # [A, Lt]
    h = h + b1_ref[...]
    h = jnp.maximum(h, 0.0) * bns_ref[...] + bnb_ref[...]
    h = jnp.tanh(h)

    # conv: Conv1d(A->C, k=1) -> attention logits
    logits = jnp.dot(w2_ref[...], h, preferred_element_type=jnp.float32)  # [C, Lt]
    logits = logits + b2_ref[...]

    # length mask over the global L axis (softmax dim=2 in the PyTorch module)
    valid = len_ref[n]
    col = l * lt + jax.lax.broadcasted_iota(jnp.int32, logits.shape, 1)
    logits = jnp.where(col < valid, logits, -jnp.inf)

    # online softmax statistics: running max + S0=Σe, S1=Σe·x, S2=Σe·x²
    m_prev = m_sc[...]                                                # [C, 1]
    m_new = jnp.maximum(m_prev, jnp.max(logits, axis=-1, keepdims=True))
    alpha = jnp.exp(m_prev - m_new)                                   # 0 on first tile
    e = jnp.exp(logits - m_new)                                       # masked cols -> 0
    ex = e * x
    s0_sc[...] = alpha * s0_sc[...] + jnp.sum(e, axis=-1, keepdims=True)
    s1_sc[...] = alpha * s1_sc[...] + jnp.sum(ex, axis=-1, keepdims=True)
    s2_sc[...] = alpha * s2_sc[...] + jnp.sum(ex * x, axis=-1, keepdims=True)
    m_sc[...] = m_new

    @pl.when(l == pl.num_programs(1) - 1)
    def _finalize():
        # only a [C,1] reciprocal once per item (the full [C,L] divide is gone)
        r = pl.reciprocal(s0_sc[...], approx=False)
        mean = s1_sc[...] * r
        var = s2_sc[...] * r - mean * mean
        std = jnp.sqrt(jnp.maximum(var, EPS))
        out_ref[:C, :] = mean                                         # [C, 1]
        out_ref[C:, :] = std                                          # [C, 1]


def attentive_statistics_pooling(x, params, lengths=None, *, l_tile=512):
    """x: [N, C, L] float32 -> [N, 2C, 1] float32 (cat(mean, std))."""
    N, C, L = x.shape
    A = params["w1"].shape[0]

    if lengths is None:
        lengths = jnp.ones((N,), jnp.float32)
    # arange(L) < lengths*L  <=>  iota < ceil(lengths*L) for integer iota.
    # Clamp to >=1 so an all-masked item cannot NaN the online softmax.
    valid = jnp.maximum(jnp.ceil(lengths * L).astype(jnp.int32), 1)

    # fold eval-mode BatchNorm1d into per-channel scale/bias
    bn_scale = params["bn_gamma"] / jnp.sqrt(params["bn_var"] + BN_EPS)
    bn_bias = params["bn_beta"] - params["bn_mean"] * bn_scale

    # pad L with zeros to a lane-aligned tile multiple (padded cols are masked)
    l_tile = _round_up(max(int(l_tile), 128), 128)
    lt = min(_round_up(L, 128), l_tile)
    L_pad = _round_up(L, lt)
    if L_pad != L:
        x = jnp.pad(x, ((0, 0), (0, 0), (0, L_pad - L)))
    n_ltiles = L_pad // lt

    grid_spec = pltpu.PrefetchScalarGridSpec(
        num_scalar_prefetch=1,
        grid=(N, n_ltiles),
        in_specs=[
            pl.BlockSpec((pl.Squeezed(), C, lt), lambda n, l, v: (n, 0, l)),  # x
            pl.BlockSpec((A, C), lambda n, l, v: (0, 0)),                     # w1
            pl.BlockSpec((A, 1), lambda n, l, v: (0, 0)),                     # b1
            pl.BlockSpec((A, 1), lambda n, l, v: (0, 0)),                     # bn scale
            pl.BlockSpec((A, 1), lambda n, l, v: (0, 0)),                     # bn bias
            pl.BlockSpec((C, A), lambda n, l, v: (0, 0)),                     # w2
            pl.BlockSpec((C, 1), lambda n, l, v: (0, 0)),                     # b2
        ],
        out_specs=pl.BlockSpec((pl.Squeezed(), 2 * C, 1), lambda n, l, v: (n, 0, 0)),
        scratch_shapes=[pltpu.VMEM((C, 1), jnp.float32)] * 4,  # m, S0, S1, S2
    )

    out = pl.pallas_call(
        _asp_kernel,
        grid_spec=grid_spec,
        out_shape=jax.ShapeDtypeStruct((N, 2 * C, 1), jnp.float32),
        compiler_params=pltpu.CompilerParams(
            dimension_semantics=("parallel", "arbitrary"),
            vmem_limit_bytes=48 * 1024 * 1024,
        ),
    )(
        valid,
        x,
        params["w1"],
        params["b1"].reshape(A, 1),
        bn_scale.reshape(A, 1),
        bn_bias.reshape(A, 1),
        params["w2"],
        params["b2"].reshape(C, 1),
    )
    return out


def _reference(x, params, lengths=None):
    """Pure-JAX reference mirroring the PyTorch forward (eval-mode BN)."""
    N, C, L = x.shape
    if lengths is None:
        lengths = jnp.ones((N,), jnp.float32)
    mask = (jnp.arange(L)[None, :] < (lengths * L)[:, None])[:, None, :]

    h = jnp.einsum("ac,ncl->nal", params["w1"], x) + params["b1"][None, :, None]
    h = jax.nn.relu(h)
    scale = params["bn_gamma"] / jnp.sqrt(params["bn_var"] + BN_EPS)
    bias = params["bn_beta"] - params["bn_mean"] * scale
    h = h * scale[None, :, None] + bias[None, :, None]
    h = jnp.tanh(h)
    logits = jnp.einsum("ca,nal->ncl", params["w2"], h) + params["b2"][None, :, None]
    logits = jnp.where(mask, logits, -jnp.inf)
    attn = jax.nn.softmax(logits, axis=2)
    mean = jnp.sum(attn * x, axis=2)
    std = jnp.sqrt(jnp.clip(jnp.sum(attn * (x - mean[:, :, None]) ** 2, axis=2),
                            EPS, None))
    return jnp.concatenate([mean, std], axis=1)[:, :, None]


if __name__ == "__main__":
    # channels=C, attention_channels=A (small demo sizes); L=200 with l_tile=128
    # exercises the multi-tile online-softmax path (and a fully masked tile for
    # the short second item).
    N, C, A, L = 2, 8, 16, 200
    key = jax.random.PRNGKey(0)
    ks = jax.random.split(key, 9)

    x = jax.random.normal(ks[0], (N, C, L), jnp.float32)
    params = dict(
        w1=jax.random.normal(ks[1], (A, C), jnp.float32) * 0.2,   # Conv1d(C->A,k=1).weight[...,0]
        b1=jax.random.normal(ks[2], (A,), jnp.float32) * 0.1,
        bn_gamma=jnp.abs(jax.random.normal(ks[3], (A,), jnp.float32)) + 0.5,
        bn_beta=jax.random.normal(ks[4], (A,), jnp.float32) * 0.1,
        bn_mean=jax.random.normal(ks[5], (A,), jnp.float32) * 0.1,
        bn_var=jnp.abs(jax.random.normal(ks[6], (A,), jnp.float32)) + 0.5,
        w2=jax.random.normal(ks[7], (C, A), jnp.float32) * 0.2,   # Conv1d(A->C,k=1).weight[...,0]
        b2=jax.random.normal(ks[8], (C,), jnp.float32) * 0.1,
    )
    lengths = jnp.array([1.0, 0.6], jnp.float32)   # second item: 120/200 frames valid

    # with explicit lengths (exercises the mask + L padding + multi-tile path)
    out = jax.block_until_ready(
        attentive_statistics_pooling(x, params, lengths, l_tile=128))
    ref = _reference(x, params, lengths)
    assert out.shape == (N, 2 * C, 1), out.shape
    assert jnp.allclose(out, ref, atol=1e-4, rtol=1e-4), \
        float(jnp.max(jnp.abs(out - ref)))

    # default lengths=None path (single tile at default l_tile)
    out2 = jax.block_until_ready(attentive_statistics_pooling(x, params))
    ref2 = _reference(x, params)
    assert jnp.allclose(out2, ref2, atol=1e-4, rtol=1e-4), \
        float(jnp.max(jnp.abs(out2 - ref2)))

    print("KERNEL_OK")
</pallas_src>

<mosaic_0001>
module attributes {stable_mosaic.version = 11 : i64} {
  func.func @_asp_kernel(%arg0: i32, %arg1: i32, %arg2: memref<2xi32, #tpu.memory_space<smem>>, %arg3: memref<1x8x128xf32, #tpu.memory_space<vmem>>, %arg4: memref<16x8xf32, #tpu.memory_space<vmem>>, %arg5: memref<16x1xf32, #tpu.memory_space<vmem>>, %arg6: memref<16x1xf32, #tpu.memory_space<vmem>>, %arg7: memref<16x1xf32, #tpu.memory_space<vmem>>, %arg8: memref<8x16xf32, #tpu.memory_space<vmem>>, %arg9: memref<8x1xf32, #tpu.memory_space<vmem>>, %arg10: memref<1x16x1xf32, #tpu.memory_space<vmem>>, %arg11: memref<8x1xf32, #tpu.memory_space<vmem>>, %arg12: memref<8x1xf32, #tpu.memory_space<vmem>>, %arg13: memref<8x1xf32, #tpu.memory_space<vmem>>, %arg14: memref<8x1xf32, #tpu.memory_space<vmem>>) attributes {dimension_semantics = [#tpu.dimension_semantics<parallel>, #tpu.dimension_semantics<arbitrary>], iteration_bounds = array<i64: 2, 2>, scalar_prefetch = 1 : i64, scratch_operands = 4 : i64, tpu.core_type = #tpu.core_type<tc>, window_params = [{transform_indices = @transform_0, window_bounds = array<i64: 1, 8, 128>}, {pipeline_mode = #tpu.pipeline_mode<synchronous>, transform_indices = @transform_1, window_bounds = array<i64: 16, 8>}, {pipeline_mode = #tpu.pipeline_mode<synchronous>, transform_indices = @transform_2, window_bounds = array<i64: 16, 1>}, {pipeline_mode = #tpu.pipeline_mode<synchronous>, transform_indices = @transform_3, window_bounds = array<i64: 16, 1>}, {pipeline_mode = #tpu.pipeline_mode<synchronous>, transform_indices = @transform_4, window_bounds = array<i64: 16, 1>}, {pipeline_mode = #tpu.pipeline_mode<synchronous>, transform_indices = @transform_5, window_bounds = array<i64: 8, 16>}, {pipeline_mode = #tpu.pipeline_mode<synchronous>, transform_indices = @transform_6, window_bounds = array<i64: 8, 1>}, {transform_indices = @transform_7, window_bounds = array<i64: 1, 16, 1>}]} {
    %c0_i32 = arith.constant 0 : i32
    %0 = arith.cmpi eq, %arg1, %c0_i32 : i32
    %1 = arith.extui %0 : i1 to i32
    %c0_i32_0 = arith.constant 0 : i32
    %2 = arith.cmpi ne, %1, %c0_i32_0 : i32
    scf.if %2 {
      %cst_39 = arith.constant 0xFF800000 : f32
      %67 = vector.broadcast %cst_39 : f32 to vector<8x1xf32>
      %c0_40 = arith.constant 0 : index
      %c0_41 = arith.constant 0 : index
      %68 = vector.load %arg11[%c0_40, %c0_41] : memref<8x1xf32, #tpu.memory_space<vmem>>, vector<8x1xf32>
      tpu.vector_store %arg11[%c0_40, %c0_41], %67 {strides = array<i32>} : memref<8x1xf32, #tpu.memory_space<vmem>>, vector<8x1xf32>,
      %cst_42 = arith.constant 0.000000e+00 : f32
      %69 = vector.broadcast %cst_42 : f32 to vector<8x1xf32>
      %c0_43 = arith.constant 0 : index
      %c0_44 = arith.constant 0 : index
      %70 = vector.load %arg12[%c0_43, %c0_44] : memref<8x1xf32, #tpu.memory_space<vmem>>, vector<8x1xf32>
      tpu.vector_store %arg12[%c0_43, %c0_44], %69 {strides = array<i32>} : memref<8x1xf32, #tpu.memory_space<vmem>>, vector<8x1xf32>,
      %cst_45 = arith.constant 0.000000e+00 : f32
      %71 = vector.broadcast %cst_45 : f32 to vector<8x1xf32>
      %c0_46 = arith.constant 0 : index
      %c0_47 = arith.constant 0 : index
      %72 = vector.load %arg13[%c0_46, %c0_47] : memref<8x1xf32, #tpu.memory_space<vmem>>, vector<8x1xf32>
      tpu.vector_store %arg13[%c0_46, %c0_47], %71 {strides = array<i32>} : memref<8x1xf32, #tpu.memory_space<vmem>>, vector<8x1xf32>,
      %cst_48 = arith.constant 0.000000e+00 : f32
      %73 = vector.broadcast %cst_48 : f32 to vector<8x1xf32>
      %c0_49 = arith.constant 0 : index
      %c0_50 = arith.constant 0 : index
      %74 = vector.load %arg14[%c0_49, %c0_50] : memref<8x1xf32, #tpu.memory_space<vmem>>, vector<8x1xf32>
      tpu.vector_store %arg14[%c0_49, %c0_50], %73 {strides = array<i32>} : memref<8x1xf32, #tpu.memory_space<vmem>>, vector<8x1xf32>,
    } else {
    }
    %c0 = arith.constant 0 : index
    %c0_1 = arith.constant 0 : index
    %c0_2 = arith.constant 0 : index
    %3 = vector.load %arg3[%c0, %c0_1, %c0_2] : memref<1x8x128xf32, #tpu.memory_space<vmem>>, vector<1x8x128xf32>
    %4 = vector.shape_cast %3 : vector<1x8x128xf32> to vector<8x128xf32>
    %c0_3 = arith.constant 0 : index
    %c0_4 = arith.constant 0 : index
    %5 = vector.load %arg4[%c0_3, %c0_4] : memref<16x8xf32, #tpu.memory_space<vmem>>, vector<16x8xf32>
    %cst = arith.constant dense<0.000000e+00> : vector<16x128xf32>
    %6 = tpu.matmul %5, %4, %cst {dimension_numbers = #tpu.dot_dimension_numbers<[1], [0], [0], [1], [0, 0, 1, 1], [], []>} : vector<16x8xf32>, vector<8x128xf32>, vector<16x128xf32> -> vector<16x128xf32>
    %c0_5 = arith.constant 0 : index
    %c0_6 = arith.constant 0 : index
    %7 = vector.load %arg5[%c0_5, %c0_6] : memref<16x1xf32, #tpu.memory_space<vmem>>, vector<16x1xf32>
    %8 = vector.broadcast %7 : vector<16x1xf32> to vector<16x128xf32>
    %9 = arith.addf %6, %8 : vector<16x128xf32>
    %cst_7 = arith.constant 0.000000e+00 : f32
    %10 = vector.broadcast %cst_7 : f32 to vector<16x128xf32>
    %11 = arith.maximumf %9, %10 : vector<16x128xf32>
    %c0_8 = arith.constant 0 : index
    %c0_9 = arith.constant 0 : index
    %12 = vector.load %arg6[%c0_8, %c0_9] : memref<16x1xf32, #tpu.memory_space<vmem>>, vector<16x1xf32>
    %13 = vector.broadcast %12 : vector<16x1xf32> to vector<16x128xf32>
    %14 = arith.mulf %11, %13 : vector<16x128xf32>
    %c0_10 = arith.constant 0 : index
    %c0_11 = arith.constant 0 : index
    %15 = vector.load %arg7[%c0_10, %c0_11] : memref<16x1xf32, #tpu.memory_space<vmem>>, vector<16x1xf32>
    %16 = vector.broadcast %15 : vector<16x1xf32> to vector<16x128xf32>
    %17 = arith.addf %14, %16 : vector<16x128xf32>
    %18 = math.tanh %17 : vector<16x128xf32>
    %c0_12 = arith.constant 0 : index
    %c0_13 = arith.constant 0 : index
    %19 = vector.load %arg8[%c0_12, %c0_13] : memref<8x16xf32, #tpu.memory_space<vmem>>, vector<8x16xf32>
    %cst_14 = arith.constant dense<0.000000e+00> : vector<8x128xf32>
    %20 = tpu.matmul %19, %18, %cst_14 {dimension_numbers = #tpu.dot_dimension_numbers<[1], [0], [0], [1], [0, 0, 1, 1], [], []>} : vector<8x16xf32>, vector<16x128xf32>, vector<8x128xf32> -> vector<8x128xf32>
    %c0_15 = arith.constant 0 : index
    %c0_16 = arith.constant 0 : index
    %21 = vector.load %arg9[%c0_15, %c0_16] : memref<8x1xf32, #tpu.memory_space<vmem>>, vector<8x1xf32>
    %22 = vector.broadcast %21 : vector<8x1xf32> to vector<8x128xf32>
    %23 = arith.addf %20, %22 : vector<8x128xf32>
    %24 = arith.index_cast %arg0 : i32 to index
    %25 = memref.load %arg2[%24] : memref<2xi32, #tpu.memory_space<smem>>
    %c128_i32 = arith.constant 128 : i32
    %26 = arith.muli %arg1, %c128_i32 : i32
    %27 = tpu.iota {dimensions = array<i32: 1>} : vector<8x128xi32>
    %28 = vector.broadcast %26 : i32 to vector<8x128xi32>
    %29 = arith.addi %28, %27 : vector<8x128xi32>
    %30 = vector.broadcast %25 : i32 to vector<8x128xi32>
    %31 = arith.cmpi slt, %29, %30 : vector<8x128xi32>
    %cst_17 = arith.constant 0xFF800000 : f32
    %32 = vector.broadcast %cst_17 : f32 to vector<8x128xf32>
    %33 = arith.select %31, %23, %32 : vector<8x128xi1>, vector<8x128xf32>
    %c0_18 = arith.constant 0 : index
    %c0_19 = arith.constant 0 : index
    %34 = vector.load %arg11[%c0_18, %c0_19] : memref<8x1xf32, #tpu.memory_space<vmem>>, vector<8x1xf32>
    %cst_20 = arith.constant dense<0xFF800000> : vector<8xf32>
    %35 = vector.multi_reduction <maximumf>, %33, %cst_20 [1] : vector<8x128xf32> to vector<8xf32>
    %36 = vector.shape_cast %35 : vector<8xf32> to vector<8x1xf32>
    %37 = arith.maximumf %34, %36 : vector<8x1xf32>
    %38 = arith.subf %34, %37 : vector<8x1xf32>
    %39 = math.exp %38 : vector<8x1xf32>
    %40 = vector.broadcast %37 : vector<8x1xf32> to vector<8x128xf32>
    %41 = arith.subf %33, %40 : vector<8x128xf32>
    %42 = math.exp %41 : vector<8x128xf32>
    %43 = arith.mulf %42, %4 : vector<8x128xf32>
    %c0_21 = arith.constant 0 : index
    %c0_22 = arith.constant 0 : index
    %44 = vector.load %arg12[%c0_21, %c0_22] : memref<8x1xf32, #tpu.memory_space<vmem>>, vector<8x1xf32>
    %45 = arith.mulf %39, %44 : vector<8x1xf32>
    %cst_23 = arith.constant dense<0.000000e+00> : vector<8xf32>
    %46 = vector.multi_reduction <add>, %42, %cst_23 [1] : vector<8x128xf32> to vector<8xf32>
    %47 = vector.shape_cast %46 : vector<8xf32> to vector<8x1xf32>
    %48 = arith.addf %45, %47 : vector<8x1xf32>
    %c0_24 = arith.constant 0 : index
    %c0_25 = arith.constant 0 : index
    %49 = vector.load %arg12[%c0_24, %c0_25] : memref<8x1xf32, #tpu.memory_space<vmem>>, vector<8x1xf32>
    tpu.vector_store %arg12[%c0_24, %c0_25], %48 {strides = array<i32>} : memref<8x1xf32, #tpu.memory_space<vmem>>, vector<8x1xf32>,
    %c0_26 = arith.constant 0 : index
    %c0_27 = arith.constant 0 : index
    %50 = vector.load %arg13[%c0_26, %c0_27] : memref<8x1xf32, #tpu.memory_space<vmem>>, vector<8x1xf32>
    %51 = arith.mulf %39, %50 : vector<8x1xf32>
    %cst_28 = arith.constant dense<0.000000e+00> : vector<8xf32>
    %52 = vector.multi_reduction <add>, %43, %cst_28 [1] : vector<8x128xf32> to vector<8xf32>
    %53 = vector.shape_cast %52 : vector<8xf32> to vector<8x1xf32>
    %54 = arith.addf %51, %53 : vector<8x1xf32>
    %c0_29 = arith.constant 0 : index
    %c0_30 = arith.constant 0 : index
    %55 = vector.load %arg13[%c0_29, %c0_30] : memref<8x1xf32, #tpu.memory_space<vmem>>, vector<8x1xf32>
    tpu.vector_store %arg13[%c0_29, %c0_30], %54 {strides = array<i32>} : memref<8x1xf32, #tpu.memory_space<vmem>>, vector<8x1xf32>,
    %c0_31 = arith.constant 0 : index
    %c0_32 = arith.constant 0 : index
    %56 = vector.load %arg14[%c0_31, %c0_32] : memref<8x1xf32, #tpu.memory_space<vmem>>, vector<8x1xf32>
    %57 = arith.mulf %39, %56 : vector<8x1xf32>
    %58 = arith.mulf %43, %4 : vector<8x128xf32>
    %cst_33 = arith.constant dense<0.000000e+00> : vector<8xf32>
    %59 = vector.multi_reduction <add>, %58, %cst_33 [1] : vector<8x128xf32> to vector<8xf32>
    %60 = vector.shape_cast %59 : vector<8xf32> to vector<8x1xf32>
    %61 = arith.addf %57, %60 : vector<8x1xf32>
    %c0_34 = arith.constant 0 : index
    %c0_35 = arith.constant 0 : index
    %62 = vector.load %arg14[%c0_34, %c0_35] : memref<8x1xf32, #tpu.memory_space<vmem>>, vector<8x1xf32>
    tpu.vector_store %arg14[%c0_34, %c0_35], %61 {strides = array<i32>} : memref<8x1xf32, #tpu.memory_space<vmem>>, vector<8x1xf32>,
    %c0_36 = arith.constant 0 : index
    %c0_37 = arith.constant 0 : index
    %63 = vector.load %arg11[%c0_36, %c0_37] : memref<8x1xf32, #tpu.memory_space<vmem>>, vector<8x1xf32>
    tpu.vector_store %arg11[%c0_36, %c0_37], %37 {strides = array<i32>} : memref<8x1xf32, #tpu.memory_space<vmem>>, vector<8x1xf32>,
    %c1_i32 = arith.constant 1 : i32
    %64 = arith.cmpi eq, %arg1, %c1_i32 : i32
    %65 = arith.extui %64 : i1 to i32
    %c0_i32_38 = arith.constant 0 : i32
    %66 = arith.cmpi ne, %65, %c0_i32_38 : i32
    scf.if %66 {
      %c0_39 = arith.constant 0 : index
      %c0_40 = arith.constant 0 : index
      %67 = vector.load %arg12[%c0_39, %c0_40] : memref<8x1xf32, #tpu.memory_space<vmem>>, vector<8x1xf32>
      %68 = tpu.reciprocal %67 : vector<8x1xf32> -> vector<8x1xf32>
      %c0_41 = arith.constant 0 : index
      %c0_42 = arith.constant 0 : index
      %69 = vector.load %arg13[%c0_41, %c0_42] : memref<8x1xf32, #tpu.memory_space<vmem>>, vector<8x1xf32>
      %70 = arith.mulf %69, %68 : vector<8x1xf32>
      %c0_43 = arith.constant 0 : index
      %c0_44 = arith.constant 0 : index
      %71 = vector.load %arg14[%c0_43, %c0_44] : memref<8x1xf32, #tpu.memory_space<vmem>>, vector<8x1xf32>
      %72 = arith.mulf %71, %68 : vector<8x1xf32>
      %73 = arith.mulf %70, %70 : vector<8x1xf32>
      %74 = arith.subf %72, %73 : vector<8x1xf32>
      %cst_45 = arith.constant 9.99999996E-13 : f32
      %75 = vector.broadcast %cst_45 : f32 to vector<8x1xf32>
      %76 = arith.maximumf %74, %75 : vector<8x1xf32>
      %77 = math.sqrt %76 : vector<8x1xf32>
      %c0_46 = arith.constant 0 : index
      %c0_47 = arith.constant 0 : index
      %c0_48 = arith.constant 0 : index
      %78 = vector.load %arg10[%c0_46, %c0_47, %c0_48] : memref<1x16x1xf32, #tpu.memory_space<vmem>>, vector<1x8x1xf32>
      %79 = vector.shape_cast %78 : vector<1x8x1xf32> to vector<8x1xf32>
      %80 = vector.shape_cast %70 : vector<8x1xf32> to vector<1x8x1xf32>
      tpu.vector_store %arg10[%c0_46, %c0_47, %c0_48], %80 {strides = array<i32>} : memref<1x16x1xf32, #tpu.memory_space<vmem>>, vector<1x8x1xf32>,
      %c0_49 = arith.constant 0 : index
      %c8 = arith.constant 8 : index
      %c0_50 = arith.constant 0 : index
      %81 = vector.load %arg10[%c0_49, %c8, %c0_50] : memref<1x16x1xf32, #tpu.memory_space<vmem>>, vector<1x8x1xf32>
      %82 = vector.shape_cast %81 : vector<1x8x1xf32> to vector<8x1xf32>
      %83 = vector.shape_cast %77 : vector<8x1xf32> to vector<1x8x1xf32>
      tpu.vector_store %arg10[%c0_49, %c8, %c0_50], %83 {strides = array<i32>} : memref<1x16x1xf32, #tpu.memory_space<vmem>>, vector<1x8x1xf32>,
    } else {
    }
    return
  }
  func.func @transform_0(%arg0: i32, %arg1: i32, %arg2: memref<2xi32, #tpu.memory_space<smem>>) -> (i32, i32, i32) {
    %c0_i32 = arith.constant 0 : i32
    %c0_i32_0 = arith.constant 0 : i32
    return %arg0, %c0_i32, %arg1 : i32, i32, i32
  }
  func.func @transform_1(%arg0: i32, %arg1: i32, %arg2: memref<2xi32, #tpu.memory_space<smem>>) -> (i32, i32) {
    %c0_i32 = arith.constant 0 : i32
    %c0_i32_0 = arith.constant 0 : i32
    %c0_i32_1 = arith.constant 0 : i32
    return %c0_i32, %c0_i32_0 : i32, i32
  }
  func.func @transform_2(%arg0: i32, %arg1: i32, %arg2: memref<2xi32, #tpu.memory_space<smem>>) -> (i32, i32) {
    %c0_i32 = arith.constant 0 : i32
    %c0_i32_0 = arith.constant 0 : i32
    %c0_i32_1 = arith.constant 0 : i32
    return %c0_i32, %c0_i32_0 : i32, i32
  }
  func.func @transform_3(%arg0: i32, %arg1: i32, %arg2: memref<2xi32, #tpu.memory_space<smem>>) -> (i32, i32) {
    %c0_i32 = arith.constant 0 : i32
    %c0_i32_0 = arith.constant 0 : i32
    %c0_i32_1 = arith.constant 0 : i32
    return %c0_i32, %c0_i32_0 : i32, i32
  }
  func.func @transform_4(%arg0: i32, %arg1: i32, %arg2: memref<2xi32, #tpu.memory_space<smem>>) -> (i32, i32) {
    %c0_i32 = arith.constant 0 : i32
    %c0_i32_0 = arith.constant 0 : i32
    %c0_i32_1 = arith.constant 0 : i32
    return %c0_i32, %c0_i32_0 : i32, i32
  }
  func.func @transform_5(%arg0: i32, %arg1: i32, %arg2: memref<2xi32, #tpu.memory_space<smem>>) -> (i32, i32) {
    %c0_i32 = arith.constant 0 : i32
    %c0_i32_0 = arith.constant 0 : i32
    %c0_i32_1 = arith.constant 0 : i32
    return %c0_i32, %c0_i32_0 : i32, i32
  }
  func.func @transform_6(%arg0: i32, %arg1: i32, %arg2: memref<2xi32, #tpu.memory_space<smem>>) -> (i32, i32) {
    %c0_i32 = arith.constant 0 : i32
    %c0_i32_0 = arith.constant 0 : i32
    %c0_i32_1 = arith.constant 0 : i32
    return %c0_i32, %c0_i32_0 : i32, i32
  }
  func.func @transform_7(%arg0: i32, %arg1: i32, %arg2: memref<2xi32, #tpu.memory_space<smem>>) -> (i32, i32, i32) {
    %c0_i32 = arith.constant 0 : i32
    %c0_i32_0 = arith.constant 0 : i32
    %c0_i32_1 = arith.constant 0 : i32
    return %arg0, %c0_i32, %c0_i32_0 : i32, i32, i32
  }
}

</mosaic_0001>

<llo_original>
// kernel: tpu_custom_call.1
$region0: #{tpu_custom_call.1}
  #allocation0 [shape = 'u32[]', space=smem, size = 0x4, offset = 0x4, fixed_abs, tag = 'smem constant byte address 0x4 - core index']
  #allocation1 [shape = 'u32[144,128]{1,0:T(1,128)}', space=vmem, size = 0x12000, scoped, tag = 'internal scratch']
  #allocation2 [shape = 'f32[8,1]{1,0:T(8,128)}', space=vmem, size = 0x1000, scoped, tag = 'scratch operand']
  #allocation3 [shape = 'f32[8,1]{1,0:T(8,128)}', space=vmem, size = 0x1000, scoped, tag = 'scratch operand']
  #allocation4 [shape = 'f32[8,1]{1,0:T(8,128)}', space=vmem, size = 0x1000, scoped, tag = 'scratch operand']
  #allocation5 [shape = 'f32[8,1]{1,0:T(8,128)}', space=vmem, size = 0x1000, scoped, tag = 'scratch operand']
  #allocation6 [shape = 's32[1]{0}', space=sflag, size = 0x4, scoped, tag = 'scoped memory for tpu_custom_call.1']
  #allocation7 [shape = 'u8[512]{0}', space=smem, size = 0x200, scoped, tag = 'prefetched SMEM operand 0']
  %s0 = inlined_call_operand.vmem [shape: s32[2], index: 0, kind: input, shape index: {}]
  %s1 = inlined_call_operand.vmem [shape: f32[2,8,256], index: 1, kind: input, shape index: {}]
  %s2 = inlined_call_operand.vmem [shape: f32[16,8], index: 2, kind: input, shape index: {}]
  %s3 = inlined_call_operand.vmem [shape: f32[16,1], index: 3, kind: input, shape index: {}]
  %s4 = inlined_call_operand.vmem [shape: f32[16,1], index: 4, kind: input, shape index: {}]
  %s5 = inlined_call_operand.vmem [shape: f32[16,1], index: 5, kind: input, shape index: {}]
  %s6 = inlined_call_operand.vmem [shape: f32[8,16], index: 6, kind: input, shape index: {}]
  %s7 = inlined_call_operand.vmem [shape: f32[8,1], index: 7, kind: input, shape index: {}]
  %s8 = inlined_call_operand.vmem [shape: f32[2,16,1], index: 8, kind: output, shape index: {}]
  %s9 = sld [smem:[#allocation0]]
  $region69: #{tpu_custom_call.1} parent=0
    _
  %s11 = ssub.s32 1, %s9
  %s12 = scalar_select 0, %s11, %s9
  %s13 = sshll.u32 %s0, 4
  %s14 = int_to_ptr.vmem [resolvable:$true] %s13
  %16 = dma.vmem_to_smem %s14, 16, [#allocation7], [#allocation6]
  %17 = dma.done [#allocation6], 16
  %18 = sfence
  loop: start=0, step=1, limit=6
  $region2: #{tpu_custom_call.1} parent=0 // loop_pre_header
    _
  $region3: #{tpu_custom_call.1} parent=0 // loop_header
    %s20 = sphi 0, %s24
    %p21 = scmp.ge.s32.totalorder %s20, 6
    %s27 = sphi 0, %s39
    %s28 = sphi 0, %s35
    %s29 = sphi 0, %s27
    %s30 = sphi 0, %s28
    %s31 = sphi 0, %s29
    %s32 = sphi 0, %s30
    %s44 = sphi 0, %s46
    %s47 = sphi 0, %s44
    %s48 = sphi 0, %s47
    %s64 = sphi 0, %s48
    %s68 = sphi 0, %s68
    %s70 = sphi 0, %s68
    %s71 = sphi 0, %s70
    %s85 = sphi 0, %s71
    %s89 = sphi 0, %s89
    %s91 = sphi 0, %s89
    %s92 = sphi 0, %s91
    %s106 = sphi 0, %s92
    %s110 = sphi 0, %s110
    %s112 = sphi 0, %s110
    %s113 = sphi 0, %s112
    %s127 = sphi 0, %s113
    %s131 = sphi 0, %s131
    %s133 = sphi 0, %s131
    %s134 = sphi 0, %s133
    %s148 = sphi 0, %s134
    %s152 = sphi 0, %s152
    %s154 = sphi 0, %s152
    %s155 = sphi 0, %s154
    %s169 = sphi 0, %s155
    %s173 = sphi 0, %s173
    %s175 = sphi 0, %s173
    %s176 = sphi 0, %s175
    %s190 = sphi 0, %s176
    %s196 = sphi 0, %s198
    %s199 = sphi 0, %s196
    %s200 = sphi 0, %s199
    %s216 = sphi 0, %s200
  $region4: #{tpu_custom_call.1} parent=0 // loop_header_branch
    %23 = sbr.rel (%p21) target = $region8
  $region5: #{tpu_custom_call.1} parent=0 // loop_body
    %s25 = ssub.s32 %s20, 1
    %s26 = ssub.s32 %s20, 2
    %s33 = sadd.s32 1, %s28
    %p34 = scmp.ge.s32.totalorder %s33, 2
    %s35 = scalar_select %p34, 0, %s33
    %s36 = sadd.s32 1, %s27
    %s37 = scalar_select %p34, %s36, %s27
    %p38 = scmp.ge.s32.totalorder %s37, 2
    %s39 = scalar_select %p38, 0, %s37
    %s40 = ssub.s32 %s27, %s39
    %s41 = ssub.s32 %s28, %s35
    %s42 = sor.u32 %s40, %s41
    %p43 = scmp.eq.s32.totalorder %s42, 0
    %s45 = sadd.s32 %s44, 1
    %s46 = scalar_select %p43, %s44, %s45
    %p49 = pneg %p43
    %p50 = scmp.eq.s32.totalorder %s20, 3
    %p51 = por %p49, %p50
    %p52 = scmp.ne.s32.totalorder %s44, %s47
    %p53 = scmp.eq.s32.totalorder %s20, 0
    %p54 = por %p52, %p53
    %p55 = scmp.ne.s32.totalorder %s44, %s47
    %p56 = scmp.eq.s32.totalorder %s25, 3
    %p57 = por %p55, %p56
    %p58 = scmp.ne.s32.totalorder %s47, %s48
    %p59 = scmp.eq.s32.totalorder %s25, 0
    %p60 = por %p58, %p59
    %p61 = scmp.ne.s32.totalorder %s47, %s48
    %p62 = scmp.eq.s32.totalorder %s26, 3
    %p63 = por %p61, %p62
    %p65 = scmp.ne.s32.totalorder %s48, %s64
    %p66 = scmp.eq.s32.totalorder %s26, 0
    %p67 = por %p65, %p66
    %s69 = sadd.s32 %s68, 1
    %p72 = scmp.eq.s32.totalorder %s20, 3
    %p73 = scmp.ne.s32.totalorder %s68, %s70
    %p74 = scmp.eq.s32.totalorder %s20, 0
    %p75 = por %p73, %p74
    %p76 = scmp.ne.s32.totalorder %s68, %s70
    %p77 = scmp.eq.s32.totalorder %s25, 3
    %p78 = por %p76, %p77
    %p79 = scmp.ne.s32.totalorder %s70, %s71
    %p80 = scmp.eq.s32.totalorder %s25, 0
    %p81 = por %p79, %p80
    %p82 = scmp.ne.s32.totalorder %s70, %s71
    %p83 = scmp.eq.s32.totalorder %s26, 3
    %p84 = por %p82, %p83
    %p86 = scmp.ne.s32.totalorder %s71, %s85
    %p87 = scmp.eq.s32.totalorder %s26, 0
    %p88 = por %p86, %p87
    %s90 = sadd.s32 %s89, 1
    %p93 = scmp.eq.s32.totalorder %s20, 3
    %p94 = scmp.ne.s32.totalorder %s89, %s91
    %p95 = scmp.eq.s32.totalorder %s20, 0
    %p96 = por %p94, %p95
    %p97 = scmp.ne.s32.totalorder %s89, %s91
    %p98 = scmp.eq.s32.totalorder %s25, 3
    %p99 = por %p97, %p98
    %p100 = scmp.ne.s32.totalorder %s91, %s92
    %p101 = scmp.eq.s32.totalorder %s25, 0
    %p102 = por %p100, %p101
    %p103 = scmp.ne.s32.totalorder %s91, %s92
    %p104 = scmp.eq.s32.totalorder %s26, 3
    %p105 = por %p103, %p104
    %p107 = scmp.ne.s32.totalorder %s92, %s106
    %p108 = scmp.eq.s32.totalorder %s26, 0
    %p109 = por %p107, %p108
    %s111 = sadd.s32 %s110, 1
    %p114 = scmp.eq.s32.totalorder %s20, 3
    %p115 = scmp.ne.s32.totalorder %s110, %s112
    %p116 = scmp.eq.s32.totalorder %s20, 0
    %p117 = por %p115, %p116
    %p118 = scmp.ne.s32.totalorder %s110, %s112
    %p119 = scmp.eq.s32.totalorder %s25, 3
    %p120 = por %p118, %p119
    %p121 = scmp.ne.s32.totalorder %s112, %s113
    %p122 = scmp.eq.s32.totalorder %s25, 0
    %p123 = por %p121, %p122
    %p124 = scmp.ne.s32.totalorder %s112, %s113
    %p125 = scmp.eq.s32.totalorder %s26, 3
    %p126 = por %p124, %p125
    %p128 = scmp.ne.s32.totalorder %s113, %s127
    %p129 = scmp.eq.s32.totalorder %s26, 0
    %p130 = por %p128, %p129
    %s132 = sadd.s32 %s131, 1
    %p135 = scmp.eq.s32.totalorder %s20, 3
    %p136 = scmp.ne.s32.totalorder %s131, %s133
    %p137 = scmp.eq.s32.totalorder %s20, 0
    %p138 = por %p136, %p137
    %p139 = scmp.ne.s32.totalorder %s131, %s133
    %p140 = scmp.eq.s32.totalorder %s25, 3
    %p141 = por %p139, %p140
    %p142 = scmp.ne.s32.totalorder %s133, %s134
    %p143 = scmp.eq.s32.totalorder %s25, 0
    %p144 = por %p142, %p143
    %p145 = scmp.ne.s32.totalorder %s133, %s134
    %p146 = scmp.eq.s32.totalorder %s26, 3
    %p147 = por %p145, %p146
    %p149 = scmp.ne.s32.totalorder %s134, %s148
    %p150 = scmp.eq.s32.totalorder %s26, 0
    %p151 = por %p149, %p150
    %s153 = sadd.s32 %s152, 1
    %p156 = scmp.eq.s32.totalorder %s20, 3
    %p157 = scmp.ne.s32.totalorder %s152, %s154
    %p158 = scmp.eq.s32.totalorder %s20, 0
    %p159 = por %p157, %p158
    %p160 = scmp.ne.s32.totalorder %s152, %s154
    %p161 = scmp.eq.s32.totalorder %s25, 3
    %p162 = por %p160, %p161
    %p163 = scmp.ne.s32.totalorder %s154, %s155
    %p164 = scmp.eq.s32.totalorder %s25, 0
    %p165 = por %p163, %p164
    %p166 = scmp.ne.s32.totalorder %s154, %s155
    %p167 = scmp.eq.s32.totalorder %s26, 3
    %p168 = por %p166, %p167
    %p170 = scmp.ne.s32.totalorder %s155, %s169
    %p171 = scmp.eq.s32.totalorder %s26, 0
    %p172 = por %p170, %p171
    %s174 = sadd.s32 %s173, 1
    %p177 = scmp.eq.s32.totalorder %s20, 3
    %p178 = scmp.ne.s32.totalorder %s173, %s175
    %p179 = scmp.eq.s32.totalorder %s20, 0
    %p180 = por %p178, %p179
    %p181 = scmp.ne.s32.totalorder %s173, %s175
    %p182 = scmp.eq.s32.totalorder %s25, 3
    %p183 = por %p181, %p182
    %p184 = scmp.ne.s32.totalorder %s175, %s176
    %p185 = scmp.eq.s32.totalorder %s25, 0
    %p186 = por %p184, %p185
    %p187 = scmp.ne.s32.totalorder %s175, %s176
    %p188 = scmp.eq.s32.totalorder %s26, 3
    %p189 = por %p187, %p188
    %p191 = scmp.ne.s32.totalorder %s176, %s190
    %p192 = scmp.eq.s32.totalorder %s26, 0
    %p193 = por %p191, %p192
    %s194 = ssub.s32 %s27, %s39
    %p195 = scmp.eq.s32.totalorder %s194, 0
    %s197 = sadd.s32 %s196, 1
    %s198 = scalar_select %p195, %s196, %s197
    %p201 = pneg %p195
    %p202 = scmp.eq.s32.totalorder %s20, 3
    %p203 = por %p201, %p202
    %p204 = scmp.ne.s32.totalorder %s196, %s199
    %p205 = scmp.eq.s32.totalorder %s20, 0
    %p206 = por %p204, %p205
    %p207 = scmp.ne.s32.totalorder %s196, %s199
    %p208 = scmp.eq.s32.totalorder %s25, 3
    %p209 = por %p207, %p208
    %p210 = scmp.ne.s32.totalorder %s199, %s200
    %p211 = scmp.eq.s32.totalorder %s25, 0
    %p212 = por %p210, %p211
    %p213 = scmp.ne.s32.totalorder %s199, %s200
    %p214 = scmp.eq.s32.totalorder %s26, 3
    %p215 = por %p213, %p214
    %p217 = scmp.ne.s32.totalorder %s200, %s216
    %p218 = scmp.eq.s32.totalorder %s26, 0
    %p219 = por %p217, %p218
    %p220 = scmp.le.s32.totalorder 1, %s20
    %p221 = scmp.lt.s32.totalorder %s20, 5
    %p222 = pnand %p220, %p221
    %p223 = pneg %p222
    // Predicated region
    $region9: #{tpu_custom_call.1} parent=5 // pred_check
      _
    $region10: #{tpu_custom_call.1} parent=5 // pred_check_branch
      %225 = sbr.rel (%p222) target = $region12
    $region11: #{tpu_custom_call.1} parent=5 // pred_region
      %s226 = ssub.s32 %s20, 1
      // Predicated region
      $region13: #{tpu_custom_call.1} parent=11 // pred_check
        %p227 = pneg %p81
      $region14: #{tpu_custom_call.1} parent=11 // pred_check_branch
        %229 = sbr.rel (%p227) target = $region16
      $region15: #{tpu_custom_call.1} parent=11 // pred_region
        _
      $region16: #{tpu_custom_call.1} parent=11 // pred_fallthru
        _
      // Predicated region
      $region17: #{tpu_custom_call.1} parent=11 // pred_check
        %p230 = pneg %p102
      $region18: #{tpu_custom_call.1} parent=11 // pred_check_branch
        %232 = sbr.rel (%p230) target = $region20
      $region19: #{tpu_custom_call.1} parent=11 // pred_region
        _
      $region20: #{tpu_custom_call.1} parent=11 // pred_fallthru
        _
      // Predicated region
      $region21: #{tpu_custom_call.1} parent=11 // pred_check
        %p233 = pneg %p123
      $region22: #{tpu_custom_call.1} parent=11 // pred_check_branch
        %235 = sbr.rel (%p233) target = $region24
      $region23: #{tpu_custom_call.1} parent=11 // pred_region
        _
      $region24: #{tpu_custom_call.1} parent=11 // pred_fallthru
        _
      // Predicated region
      $region25: #{tpu_custom_call.1} parent=11 // pred_check
        %p236 = pneg %p144
      $region26: #{tpu_custom_call.1} parent=11 // pred_check_branch
        %238 = sbr.rel (%p236) target = $region28
      $region27: #{tpu_custom_call.1} parent=11 // pred_region
        _
      $region28: #{tpu_custom_call.1} parent=11 // pred_fallthru
        _
      // Predicated region
      $region29: #{tpu_custom_call.1} parent=11 // pred_check
        %p239 = pneg %p165
      $region30: #{tpu_custom_call.1} parent=11 // pred_check_branch
        %241 = sbr.rel (%p239) target = $region32
      $region31: #{tpu_custom_call.1} parent=11 // pred_region
        _
      $region32: #{tpu_custom_call.1} parent=11 // pred_fallthru
        _
      // Predicated region
      $region33: #{tpu_custom_call.1} parent=11 // pred_check
        %p242 = pneg %p186
      $region34: #{tpu_custom_call.1} parent=11 // pred_check_branch
        %244 = sbr.rel (%p242) target = $region36
      $region35: #{tpu_custom_call.1} parent=11 // pred_region
        _
      $region36: #{tpu_custom_call.1} parent=11 // pred_fallthru
        _
    $region12: #{tpu_custom_call.1} parent=5 // pred_fallthru
      _
    %p245 = scmp.lt.s32.totalorder %s20, 4
    // Predicated region
    $region37: #{tpu_custom_call.1} parent=5 // pred_check
      %p246 = pneg %p245
    $region38: #{tpu_custom_call.1} parent=5 // pred_check_branch
      %248 = sbr.rel (%p246) target = $region40
    $region39: #{tpu_custom_call.1} parent=5 // pred_region
      // Predicated region
      $region41: #{tpu_custom_call.1} parent=39 // pred_check
        %p249 = pneg %p54
      $region42: #{tpu_custom_call.1} parent=39 // pred_check_branch
        %251 = sbr.rel (%p249) target = $region44
      $region43: #{tpu_custom_call.1} parent=39 // pred_region
        %p252 = scmp.lt.s32.totalorder %s27, 1
        %s253 = scalar_select %p252, %s27, 1
        %p254 = scmp.lt.s32.totalorder %s28, 1
        %s255 = scalar_select %p254, %s28, 1
        %s256 = smul.addr %s253, 2
        %s257 = sadd.s32 %s255, %s256
        %s258 = smul.addr %s257, 8
        %s259 = scalar_lea.vmem %s1, %s258
      $region44: #{tpu_custom_call.1} parent=39 // pred_fallthru
        _
    $region40: #{tpu_custom_call.1} parent=5 // pred_fallthru
      _
    %p260 = scmp.le.s32.totalorder 1, %s20
    %p261 = scmp.lt.s32.totalorder %s20, 5
    %p262 = pnand %p260, %p261
    %p263 = pneg %p262
    // Predicated region
    $region45: #{tpu_custom_call.1} parent=5 // pred_check
      _
    $region46: #{tpu_custom_call.1} parent=5 // pred_check_branch
      %265 = sbr.rel (%p262) target = $region48
    $region47: #{tpu_custom_call.1} parent=5 // pred_region
      %s266 = ssub.s32 %s20, 1
      %p267 = scmp.lt.s32.totalorder %s29, 1
      %s268 = scalar_select %p267, %s29, 1
      %p269 = scmp.lt.s32.totalorder %s30, 1
      %s270 = scalar_select %p269, %s30, 1
      %s271 = smul.addr %s268, 2
      %s272 = sadd.s32 %s270, %s271
      %s273 = smul.addr %s272, 8
      %s274 = scalar_lea.vmem %s1, %s273
      %p275 = pneg %p60
      %p276 = pneg %p57
      %p277 = pneg %p81
      %p278 = pneg %p78
      %p279 = pneg %p102
      %p280 = pneg %p99
      %p281 = pneg %p123
      %p282 = pneg %p120
      %p283 = pneg %p144
      %p284 = pneg %p141
      %p285 = pneg %p165
      %p286 = pneg %p162
      %p287 = pneg %p186
      %p288 = pneg %p183
      %p289 = pneg %p212
      %p290 = pneg %p209
      %p291 = scmp.lt.s32.totalorder %s29, 1
      %s292 = scalar_select %p291, %s29, 1
      %s293 = smul.addr %s292, 2
      %s294 = smul.addr %s293, 8
      %s295 = scalar_lea.vmem %s8, %s294
      %p296 = scmp.lt.s32.totalorder %s29, 1
      %s297 = scalar_select %p296, %s29, 1
      %p298 = scmp.lt.s32.totalorder %s30, 1
      %s299 = scalar_select %p298, %s30, 1
      %s300 = smul.addr %s297, 2
      %s301 = sadd.s32 %s299, %s300
      %s302 = smul.addr %s301, 8
      %s303 = scalar_lea.vmem %s1, %s302
      %p304 = scmp.lt.s32.totalorder %s29, 1
      %s305 = scalar_select %p304, %s29, 1
      %s306 = smul.addr %s305, 2
      %s307 = smul.addr %s306, 8
      %s308 = scalar_lea.vmem %s8, %s307
      %p309 = scmp.eq.s32.totalorder %s30, 0
      // Predicated region
      $region49: #{tpu_custom_call.1} parent=47 // pred_check
        %p310 = pneg %p309
      $region50: #{tpu_custom_call.1} parent=47 // pred_check_branch
        %312 = sbr.rel (%p310) target = $region52
      $region51: #{tpu_custom_call.1} parent=47 // pred_region
        %vm313 = vcmask 7168
        %314 = vst.msk [vmem:[#allocation2] sm:$0xff] %vm313, -inf
        %315 = vst.msk [vmem:[#allocation3] sm:$0xff] %vm313, 0.0
        %316 = vst.msk [vmem:[#allocation4] sm:$0xff] %vm313, 0.0
        %317 = vst.msk [vmem:[#allocation5] sm:$0xff] %vm313, 0.0
      $region52: #{tpu_custom_call.1} parent=47 // pred_fallthru
        _
      %v318 = vld [vmem:[%s303] sm:$0xff]
      %v319 = vld [vmem:[%s2] sm:$0xff]
      %v320 = vld [vmem:[%s2 + $0x8] sm:$0xff]
      %v321 = vld [vmem:[%s3] sm:$0xff]
      %v322 = vld [vmem:[%s3 + $0x8] sm:$0xff]
      %324 = vset.pattern.permute.xlu0 0
      %325 = vperm.xlu0 %324, %v321
      %v326 = vpop.permute.xlu0 %325
      %329 = vset.pattern.permute.xlu0 0
      %330 = vperm.xlu0 %329, %v322
      %v331 = vpop.permute.xlu0 %330
      %vm333 = vcmask 64512
      %v335 = vsel %vm333, %v319, 0
      %v338 = vsel %vm333, %v320, 0
      %340 = vmatprep.subr.mxu0 0.0
      %341 = vmatpush1.msra.mxu0 %v318
      %342 = vmatprep.subr.mxu0 0.0
      %343 = vmatpush1.msra.mxu0 0.0
      %344 = vmatprep.subr.mxu0 0.0
      %345 = vmatpush1.msra.mxu0 0.0
      %346 = vmatprep.subr.mxu0 0.0
      %347 = vmatpush1.msra.mxu0 0.0
      %348 = vmatprep.subr.mxu0 0.0
      %349 = vmatpush1.msra.mxu0 0.0
      %350 = vmatprep.subr.mxu0 0.0
      %351 = vmatpush1.msra.mxu0 0.0
      %352 = vmatprep.subr.mxu0 0.0
      %353 = vmatpush1.msra.mxu0 0.0
      %354 = vmatprep.subr.mxu0 0.0
      %355 = vmatpush1.msra.mxu0 0.0
      %356 = vmatprep.subr.mxu0 0.0
      %357 = vmatpush1.msra.mxu0 0.0
      %358 = vmatprep.subr.mxu0 0.0
      %359 = vmatpush1.msra.mxu0 0.0
      %360 = vmatprep.subr.mxu0 0.0
      %361 = vmatpush1.msra.mxu0 0.0
      %362 = vmatprep.subr.mxu0 0.0
      %363 = vmatpush1.msra.mxu0 0.0
      %364 = vmatprep.subr.mxu0 0.0
      %365 = vmatpush1.msra.mxu0 0.0
      %366 = vmatprep.subr.mxu0 0.0
      %367 = vmatpush1.msra.mxu0 0.0
      %368 = vmatprep.subr.mxu0 0.0
      %369 = vmatpush1.msra.mxu0 0.0
      %370 = vmatprep.subr.mxu0 0.0
      %371 = vmatpush1.msra.mxu0 0.0
      %372 = vmatprep.subr.mxu0 0.0
      %373 = vmatpush1.msra.mxu0 0.0
      %374 = vmatprep.subr.mxu0 0.0
      %375 = vmatpush1.msra.mxu0 0.0
      %376 = vmatprep.subr.mxu0 0.0
      %377 = vmatpush1.msra.mxu0 0.0
      %378 = vmatprep.subr.mxu0 0.0
      %379 = vmatpush1.msra.mxu0 0.0
      %380 = vmatprep.subr.mxu0 0.0
      %381 = vmatpush1.msra.mxu0 0.0
      %382 = vmatprep.subr.mxu0 0.0
      %383 = vmatpush1.msra.mxu0 0.0
      %384 = vmatprep.subr.mxu0 0.0
      %385 = vmatpush1.msra.mxu0 0.0
      %386 = vmatprep.subr.mxu0 0.0
      %387 = vmatpush1.msra.mxu0 0.0
      %388 = vmatprep.subr.mxu0 0.0
      %389 = vmatpush1.msra.mxu0 0.0
      %390 = vmatprep.subr.mxu0 0.0
      %391 = vmatpush1.msra.mxu0 0.0
      %392 = vmatprep.subr.mxu0 0.0
      %393 = vmatpush1.msra.mxu0 0.0
      %394 = vmatprep.subr.mxu0 0.0
      %395 = vmatpush1.msra.mxu0 0.0
      %396 = vmatprep.subr.mxu0 0.0
      %397 = vmatpush1.msra.mxu0 0.0
      %398 = vmatprep.subr.mxu0 0.0
      %399 = vmatpush1.msra.mxu0 0.0
      %400 = vmatprep.subr.mxu0 0.0
      %401 = vmatpush1.msra.mxu0 0.0
      %402 = vmatprep.subr.mxu0 0.0
      %403 = vmatpush1.msra.mxu0 0.0
      %404 = vmatprep.mubr.f32.mxu0 0.0
      %405 = vmatmul.mubr.f32.gmra.mrb[0].mxu0 %v335
      %v406 = vpop.f32.mrb[0].mxu0
      %v407 = vadd.f32 %v326, %v406
      %v408 = vpop.f32.mrb[0].mxu0
      %409 = vmatprep.mubr.f32.mxu0 0.0
      %410 = vmatmul.mubr.f32.gmra.mrb[0].mxu0 %v338
      %v411 = vpop.f32.mrb[0].mxu0
      %v412 = vadd.f32 %v331, %v411
      %v413 = vpop.f32.mrb[0].mxu0
      %414 = vdwg.mxu0
      %v415 = vmax.f32 %v407, 0.0
      %v416 = vmax.f32 %v412, 0.0
      %v417 = vld [vmem:[%s4] sm:$0xff]
      %v418 = vld [vmem:[%s4 + $0x8] sm:$0xff]
      %420 = vset.pattern.permute.xlu0 0
      %421 = vperm.xlu0 %420, %v417
      %v422 = vpop.permute.xlu0 %421
      %425 = vset.pattern.permute.xlu0 0
      %426 = vperm.xlu0 %425, %v418
      %v427 = vpop.permute.xlu0 %426
      %v429 = vmul.f32 %v415, %v422
      %v430 = vmul.f32 %v416, %v427
      %v431 = vld [vmem:[%s5] sm:$0xff]
      %v432 = vld [vmem:[%s5 + $0x8] sm:$0xff]
      %434 = vset.pattern.permute.xlu0 0
      %435 = vperm.xlu0 %434, %v431
      %v436 = vpop.permute.xlu0 %435
      %439 = vset.pattern.permute.xlu0 0
      %440 = vperm.xlu0 %439, %v432
      %v441 = vpop.permute.xlu0 %440
      %v443 = vadd.f32 %v429, %v436
      %v444 = vadd.f32 %v430, %v441
      %v445 = vtanh.pop %v443
      %v446 = vtanh.pop %v444
      %v447 = vld [vmem:[%s6] sm:$0xff]
      %v448 = vld [vmem:[%s7] sm:$0xff]
      %450 = vset.pattern.permute.xlu0 0
      %451 = vperm.xlu0 %450, %v448
      %v452 = vpop.permute.xlu0 %451
      %vm454 = vcmask 130048
      %v456 = vsel %vm454, %v447, 0
      %458 = vmatprep.subr.mxu0 0.0
      %459 = vmatpush1.msra.mxu0 %v445
      %460 = vmatprep.subr.mxu0 0.0
      %461 = vmatpush1.msra.mxu0 %v446
      %462 = vmatprep.subr.mxu0 0.0
      %463 = vmatpush1.msra.mxu0 0.0
      %464 = vmatprep.subr.mxu0 0.0
      %465 = vmatpush1.msra.mxu0 0.0
      %466 = vmatprep.subr.mxu0 0.0
      %467 = vmatpush1.msra.mxu0 0.0
      %468 = vmatprep.subr.mxu0 0.0
      %469 = vmatpush1.msra.mxu0 0.0
      %470 = vmatprep.subr.mxu0 0.0
      %471 = vmatpush1.msra.mxu0 0.0
      %472 = vmatprep.subr.mxu0 0.0
      %473 = vmatpush1.msra.mxu0 0.0
      %474 = vmatprep.subr.mxu0 0.0
      %475 = vmatpush1.msra.mxu0 0.0
      %476 = vmatprep.subr.mxu0 0.0
      %477 = vmatpush1.msra.mxu0 0.0
      %478 = vmatprep.subr.mxu0 0.0
      %479 = vmatpush1.msra.mxu0 0.0
      %480 = vmatprep.subr.mxu0 0.0
      %481 = vmatpush1.msra.mxu0 0.0
      %482 = vmatprep.subr.mxu0 0.0
      %483 = vmatpush1.msra.mxu0 0.0
      %484 = vmatprep.subr.mxu0 0.0
      %485 = vmatpush1.msra.mxu0 0.0
      %486 = vmatprep.subr.mxu0 0.0
      %487 = vmatpush1.msra.mxu0 0.0
      %488 = vmatprep.subr.mxu0 0.0
      %489 = vmatpush1.msra.mxu0 0.0
      %490 = vmatprep.subr.mxu0 0.0
      %491 = vmatpush1.msra.mxu0 0.0
      %492 = vmatprep.subr.mxu0 0.0
      %493 = vmatpush1.msra.mxu0 0.0
      %494 = vmatprep.subr.mxu0 0.0
      %495 = vmatpush1.msra.mxu0 0.0
      %496 = vmatprep.subr.mxu0 0.0
      %497 = vmatpush1.msra.mxu0 0.0
      %498 = vmatprep.subr.mxu0 0.0
      %499 = vmatpush1.msra.mxu0 0.0
      %500 = vmatprep.subr.mxu0 0.0
      %501 = vmatpush1.msra.mxu0 0.0
      %502 = vmatprep.subr.mxu0 0.0
      %503 = vmatpush1.msra.mxu0 0.0
      %504 = vmatprep.subr.mxu0 0.0
      %505 = vmatpush1.msra.mxu0 0.0
      %506 = vmatprep.subr.mxu0 0.0
      %507 = vmatpush1.msra.mxu0 0.0
      %508 = vmatprep.subr.mxu0 0.0
      %509 = vmatpush1.msra.mxu0 0.0
      %510 = vmatprep.subr.mxu0 0.0
      %511 = vmatpush1.msra.mxu0 0.0
      %512 = vmatprep.subr.mxu0 0.0
      %513 = vmatpush1.msra.mxu0 0.0
      %514 = vmatprep.subr.mxu0 0.0
      %515 = vmatpush1.msra.mxu0 0.0
      %516 = vmatprep.subr.mxu0 0.0
      %517 = vmatpush1.msra.mxu0 0.0
      %518 = vmatprep.subr.mxu0 0.0
      %519 = vmatpush1.msra.mxu0 0.0
      %520 = vmatprep.subr.mxu0 0.0
      %521 = vmatpush1.msra.mxu0 0.0
      %522 = vmatprep.mubr.f32.mxu0 0.0
      %523 = vmatmul.mubr.f32.gmra.mrb[0].mxu0 %v456
      %v524 = vpop.f32.mrb[0].mxu0
      %v525 = vadd.f32 %v452, %v524
      %v526 = vpop.f32.mrb[0].mxu0
      %527 = vdwg.mxu0
      %s528 = sld [smem:[#allocation7 + %s29]]
      %s529 = smul.u32 %s30, 128
      %v530 = vlaneseq
      %v531 = vand.u32 %v530, 127
      %v532 = vstv %s529
      %v533 = vadd.s32 %v532, %v531
      %v534 = vstv %s528
      %vm535 = vcmp.lt.s32.totalorder %v533, %v534
      %v536 = vsel %vm535, %v525, -inf
      %v537 = vld [vmem:[#allocation2] sm:$0xff]
      %538 = vmax.xlane.f32.xlu0 %v536
      %v539 = vpop.xlane.xlu0 %538
      %v540 = vmax.f32 %v537, %v539
      %v541 = vsub.f32 %v537, %v540
      %v542 = vmul.f32 %v541, 1.442695
      %v543 = vpow.pop %v542
      %545 = vset.pattern.permute.xlu0 0
      %546 = vperm.xlu0 %545, %v540
      %v547 = vpop.permute.xlu0 %546
      %v549 = vsub.f32 %v536, %v547
      %v550 = vmul.f32 %v549, 1.442695
      %v551 = vpow.pop %v550
      %v552 = vmul.f32 %v551, %v318
      %v553 = vld [vmem:[#allocation3] sm:$0xff]
      %v554 = vmul.f32 %v543, %v553
      %555 = vadd.xlane.f32.xlu0 %v551
      %v556 = vpop.xlane.xlu0 %555
      %v557 = vadd.f32 %v554, %v556
      %vm558 = vcmask 7168
      %559 = vst.msk [vmem:[#allocation3] sm:$0xff] %vm558, %v557
      %v560 = vld [vmem:[#allocation4] sm:$0xff]
      %v561 = vmul.f32 %v543, %v560
      %562 = vadd.xlane.f32.xlu0 %v552
      %v563 = vpop.xlane.xlu0 %562
      %v564 = vadd.f32 %v561, %v563
      %565 = vst.msk [vmem:[#allocation4] sm:$0xff] %vm558, %v564
      %v566 = vld [vmem:[#allocation5] sm:$0xff]
      %v567 = vmul.f32 %v543, %v566
      %v568 = vmul.f32 %v552, %v318
      %569 = vadd.xlane.f32.xlu0 %v568
      %v570 = vpop.xlane.xlu0 %569
      %v571 = vadd.f32 %v567, %v570
      %572 = vst.msk [vmem:[#allocation5] sm:$0xff] %vm558, %v571
      %573 = vst.msk [vmem:[#allocation2] sm:$0xff] %vm558, %v540
      %p574 = scmp.eq.s32.totalorder %s30, 1
      // Predicated region
      $region53: #{tpu_custom_call.1} parent=47 // pred_check
        %p575 = pneg %p574
      $region54: #{tpu_custom_call.1} parent=47 // pred_check_branch
        %577 = sbr.rel (%p575) target = $region56
      $region55: #{tpu_custom_call.1} parent=47 // pred_region
        %v578 = vld [vmem:[#allocation3] sm:$0xff]
        %v579 = vrcp.pop %v578
        %v580 = vld [vmem:[#allocation4] sm:$0xff]
        %v581 = vmul.f32 %v580, %v579
        %v582 = vld [vmem:[#allocation5] sm:$0xff]
        %v583 = vmul.f32 %v582, %v579
        %v584 = vmul.f32 %v581, %v581
        %v585 = vsub.f32 %v583, %v584
        %v586 = vmax.f32 %v585, 1e-12
        %v587 = vrsqrt.pop %v586
        %v588 = vmul.f32 %v586, %v587
        %vm589 = vcmp.eq.f32.partialorder %v586, inf
        %v590 = vsel %vm589, %v586, %v588
        %vm591 = vcmp.eq.f32.partialorder %v586, 0.0
        %v592 = vand.u32 %v586, 2147483648
        %v593 = vsel %vm591, %v592, %v590
        %594 = vst.msk [vmem:[%s308] sm:$0xff] %vm558, %v581
        %595 = vst.msk [vmem:[%s308 + $0x8] sm:$0xff] %vm558, %v593
      $region56: #{tpu_custom_call.1} parent=47 // pred_fallthru
        _
      %p596 = scmp.lt.s32.totalorder %s29, 1
      %s597 = scalar_select %p596, %s29, 1
      %s598 = smul.addr %s597, 2
      %s599 = smul.addr %s598, 8
      %s600 = scalar_lea.vmem %s8, %s599
      // Predicated region
      $region57: #{tpu_custom_call.1} parent=47 // pred_check
        %p601 = pneg %p209
      $region58: #{tpu_custom_call.1} parent=47 // pred_check_branch
        %603 = sbr.rel (%p601) target = $region60
      $region59: #{tpu_custom_call.1} parent=47 // pred_region
        _
      $region60: #{tpu_custom_call.1} parent=47 // pred_fallthru
        _
    $region48: #{tpu_custom_call.1} parent=5 // pred_fallthru
      _
    %p604 = scmp.le.s32.totalorder 2, %s20
    // Predicated region
    $region61: #{tpu_custom_call.1} parent=5 // pred_check
      %p605 = pneg %p604
    $region62: #{tpu_custom_call.1} parent=5 // pred_check_branch
      %607 = sbr.rel (%p605) target = $region64
    $region63: #{tpu_custom_call.1} parent=5 // pred_region
      %s608 = ssub.s32 %s20, 2
      // Predicated region
      $region65: #{tpu_custom_call.1} parent=63 // pred_check
        %p609 = pneg %p215
      $region66: #{tpu_custom_call.1} parent=63 // pred_check_branch
        %611 = sbr.rel (%p609) target = $region68
      $region67: #{tpu_custom_call.1} parent=63 // pred_region
        %p612 = scmp.lt.s32.totalorder %s31, 1
        %s613 = scalar_select %p612, %s31, 1
        %s614 = smul.addr %s613, 2
        %s615 = smul.addr %s614, 8
        %s616 = scalar_lea.vmem %s8, %s615
      $region68: #{tpu_custom_call.1} parent=63 // pred_fallthru
        _
    $region64: #{tpu_custom_call.1} parent=5 // pred_fallthru
      _
  $region6: #{tpu_custom_call.1} parent=0 // loop_footer
    %s24 = sadd.s32 1, %s20
  $region7: #{tpu_custom_call.1} parent=0 // loop_footer_branch
    %19 = sbr.rel target = $region3
  $region8: #{tpu_custom_call.1} parent=0 // loop_exit
    _

</llo_original>
